<compile_context>
chip_gen: v7x
topology: tpu7x:2x2x1
jax: 0.10.0
libtpu: 0.0.40
codegen_flags: <defaults>
</compile_context>

<pallas_src>
import functools

import jax
import jax.numpy as jnp
from jax.experimental import pallas as pl
from jax.experimental.pallas import tpu as pltpu


def _round_up(x, m):
    return (x + m - 1) // m * m


def _pq_kernel(x_ref, we_ref, wd_ref, o_ref, acc_ref, *, rating):
    """Grid = (batch_tiles, item_tiles, user_tiles); user (K) axis innermost.

    acc_ref accumulates h = x @ w_enc_t in f32 across K tiles; at the last K tile the
    decoder matmul + activation run fused and the (TM, TN) output tile is stored.
    """
    k = pl.program_id(2)

    @pl.when(k == 0)
    def _():
        acc_ref[...] = jnp.zeros_like(acc_ref)

    # encoder partial: (TM, TK) @ (TK, R_pad) -> accumulate in f32
    acc_ref[...] += jnp.dot(x_ref[...], we_ref[...],
                            preferred_element_type=jnp.float32)

    @pl.when(k == pl.num_programs(2) - 1)
    def _():
        # decoder: (TM, R_pad) @ (R_pad, TN) on the MXU, f32 accumulation
        h = acc_ref[...].astype(wd_ref.dtype)
        y = jnp.dot(h, wd_ref[...], preferred_element_type=jnp.float32)
        if rating == "binary":
            y = jnp.tanh(y)
        elif rating == "five-stars":
            y = jnp.clip(y, 0.0, 5.0)
        else:
            raise KeyError("unavailable rating scale")
        o_ref[...] = y.astype(o_ref.dtype)


def pq_forward(x, w_enc, w_dec, rating="binary", *, compute_dtype=jnp.bfloat16,
               tm=None, tn=None, tk=None):
    """Pallas-fused forward of PQ: act((x @ w_enc^T) @ w_dec^T).

    x:     (batch, num_users)
    w_enc: (rank, num_users)   -- PyTorch nn.Linear layout
    w_dec: (num_items, rank)   -- PyTorch nn.Linear layout
    returns (batch, num_items) in x.dtype.
    """
    if rating not in ("binary", "five-stars"):
        raise KeyError("unavailable rating scale")

    batch, num_users = x.shape
    rank, nu = w_enc.shape
    num_items, r2 = w_dec.shape
    assert nu == num_users and r2 == rank
    out_dtype = x.dtype

    # Tile sizes (sublane multiple 16 for bf16 inputs, 8 otherwise; lanes multiples of 128).
    sub = 16 if jnp.dtype(compute_dtype) == jnp.dtype(jnp.bfloat16) else 8
    if tm is None:
        tm = min(128, _round_up(batch, sub))
    if tk is None:
        tk = min(512, _round_up(num_users, 128))
    if tn is None:
        tn = min(512, _round_up(num_items, 128))

    b_pad = _round_up(batch, tm)
    nu_pad = _round_up(num_users, tk)
    ni_pad = _round_up(num_items, tn)
    r_pad = _round_up(rank, 128)

    # Wrapper-side layout plumbing (free relative to the matmuls):
    #  - pre-transpose weights so both kernel dots are [M,K]x[K,N] with no .T
    #  - zero-pad to tile multiples (numerically exact for matmul + tanh/clip)
    #  - cast matmul inputs to compute_dtype (bf16 default) for the MXU
    x_p = jnp.zeros((b_pad, nu_pad), compute_dtype).at[:batch, :num_users].set(
        x.astype(compute_dtype))
    we_t = jnp.zeros((nu_pad, r_pad), compute_dtype).at[:num_users, :rank].set(
        w_enc.T.astype(compute_dtype))
    wd_t = jnp.zeros((r_pad, ni_pad), compute_dtype).at[:rank, :num_items].set(
        w_dec.T.astype(compute_dtype))

    grid = (b_pad // tm, ni_pad // tn, nu_pad // tk)

    itemsize = jnp.dtype(compute_dtype).itemsize
    cost = pl.CostEstimate(
        flops=2 * b_pad * nu_pad * r_pad + 2 * b_pad * r_pad * ni_pad,
        transcendentals=b_pad * ni_pad if rating == "binary" else 0,
        bytes_accessed=(x_p.size + we_t.size + wd_t.size) * itemsize
        + b_pad * ni_pad * jnp.dtype(out_dtype).itemsize,
    )

    kernel = functools.partial(_pq_kernel, rating=rating)

    out_p = pl.pallas_call(
        kernel,
        out_shape=jax.ShapeDtypeStruct((b_pad, ni_pad), out_dtype),
        grid_spec=pltpu.PrefetchScalarGridSpec(
            num_scalar_prefetch=0,
            grid=grid,
            in_specs=[
                pl.BlockSpec((tm, tk), lambda i, j, k: (i, k)),       # x
                pl.BlockSpec((tk, r_pad), lambda i, j, k: (k, 0)),    # w_enc^T
                pl.BlockSpec((r_pad, tn), lambda i, j, k: (0, j)),    # w_dec^T
            ],
            out_specs=pl.BlockSpec((tm, tn), lambda i, j, k: (i, j)),
            scratch_shapes=[pltpu.VMEM((tm, r_pad), jnp.float32)],    # h accumulator
        ),
        compiler_params=pltpu.CompilerParams(
            dimension_semantics=("parallel", "parallel", "arbitrary")),
        cost_estimate=cost,
    )(x_p, we_t, wd_t)

    return out_p[:batch, :num_items]


def _ref_forward(x, w_enc, w_dec, rating):
    y = x @ w_enc.T @ w_dec.T
    if rating == "binary":
        return jnp.tanh(y)
    return jnp.clip(y, 0.0, 5.0)


def _make_inputs(key, batch, num_users, num_items, rank):
    kx, ke, kd = jax.random.split(key, 3)
    x = jax.random.normal(kx, (batch, num_users), dtype=jnp.float32)
    # nn.Linear-style uniform(-1/sqrt(fan_in), 1/sqrt(fan_in)) init.
    w_enc = jax.random.uniform(
        ke, (rank, num_users), dtype=jnp.float32,
        minval=-1.0 / jnp.sqrt(num_users), maxval=1.0 / jnp.sqrt(num_users))
    w_dec = jax.random.uniform(
        kd, (num_items, rank), dtype=jnp.float32,
        minval=-1.0 / jnp.sqrt(rank), maxval=1.0 / jnp.sqrt(rank))
    return x, w_enc, w_dec


if __name__ == "__main__":
    key = jax.random.PRNGKey(0)

    # 1) Small, module-consistent shapes; both ratings; default bf16 MXU path.
    batch, num_users, num_items, rank = 8, 32, 64, 16
    x, w_enc, w_dec = _make_inputs(key, batch, num_users, num_items, rank)
    for rating in ("binary", "five-stars"):
        out = jax.block_until_ready(pq_forward(x, w_enc, w_dec, rating=rating))
        ref = _ref_forward(x, w_enc, w_dec, rating)
        assert out.shape == (batch, num_items)
        assert jnp.allclose(out, ref, atol=5e-2, rtol=5e-2), f"bf16 mismatch ({rating})"

    # 2) f32 compute path (v5e-friendly), tight tolerance.
    out = jax.block_until_ready(
        pq_forward(x, w_enc, w_dec, rating="binary", compute_dtype=jnp.float32))
    ref = _ref_forward(x, w_enc, w_dec, "binary")
    assert jnp.allclose(out, ref, atol=1e-5, rtol=1e-5), "f32 mismatch"

    # 3) Odd shapes + forced small tiles: exercises padding, multi-tile grid,
    #    K-reduction accumulator and the fused epilogue.
    x2, we2, wd2 = _make_inputs(jax.random.PRNGKey(1), 20, 200, 300, 24)
    out2 = jax.block_until_ready(
        pq_forward(x2, we2, wd2, rating="five-stars", tm=16, tn=128, tk=128))
    ref2 = _ref_forward(x2, we2, wd2, "five-stars")
    assert out2.shape == (20, 300)
    assert jnp.allclose(out2, ref2, atol=5e-2, rtol=5e-2), "tiled bf16 mismatch"

    print("KERNEL_OK")
</pallas_src>

<mosaic_0001>
module attributes {stable_mosaic.version = 11 : i64} {
  func.func @_pq_kernel(%arg0: i32, %arg1: i32, %arg2: i32, %arg3: memref<16x128xbf16, #tpu.memory_space<vmem>>, %arg4: memref<128x128xbf16, #tpu.memory_space<vmem>>, %arg5: memref<128x128xbf16, #tpu.memory_space<vmem>>, %arg6: memref<16x128xf32, #tpu.memory_space<vmem>>, %arg7: memref<16x128xf32, #tpu.memory_space<vmem>>) attributes {dimension_semantics = [#tpu.dimension_semantics<parallel>, #tpu.dimension_semantics<parallel>, #tpu.dimension_semantics<arbitrary>], iteration_bounds = array<i64: 1, 1, 1>, scalar_prefetch = 0 : i64, scratch_operands = 1 : i64, tpu.core_type = #tpu.core_type<tc>, window_params = [{transform_indices = @transform_0, window_bounds = array<i64: 16, 128>}, {transform_indices = @transform_1, window_bounds = array<i64: 128, 128>}, {transform_indices = @transform_2, window_bounds = array<i64: 128, 128>}, {transform_indices = @transform_3, window_bounds = array<i64: 16, 128>}]} {
    %c0_i32 = arith.constant 0 : i32
    %0 = arith.cmpi eq, %arg2, %c0_i32 : i32
    %1 = arith.extui %0 : i1 to i32
    %c0_i32_0 = arith.constant 0 : i32
    %2 = arith.cmpi ne, %1, %c0_i32_0 : i32
    scf.if %2 {
      %cst_10 = arith.constant 0.000000e+00 : f32
      %12 = vector.broadcast %cst_10 : f32 to vector<16x128xf32>
      %c0_11 = arith.constant 0 : index
      %c0_12 = arith.constant 0 : index
      %13 = vector.load %arg7[%c0_11, %c0_12] : memref<16x128xf32, #tpu.memory_space<vmem>>, vector<16x128xf32>
      tpu.vector_store %arg7[%c0_11, %c0_12], %12 {strides = array<i32>} : memref<16x128xf32, #tpu.memory_space<vmem>>, vector<16x128xf32>,
    } else {
    }
    %c0 = arith.constant 0 : index
    %c0_1 = arith.constant 0 : index
    %3 = vector.load %arg7[%c0, %c0_1] : memref<16x128xf32, #tpu.memory_space<vmem>>, vector<16x128xf32>
    %c0_2 = arith.constant 0 : index
    %c0_3 = arith.constant 0 : index
    %4 = vector.load %arg3[%c0_2, %c0_3] : memref<16x128xbf16, #tpu.memory_space<vmem>>, vector<16x128xbf16>
    %c0_4 = arith.constant 0 : index
    %c0_5 = arith.constant 0 : index
    %5 = vector.load %arg4[%c0_4, %c0_5] : memref<128x128xbf16, #tpu.memory_space<vmem>>, vector<128x128xbf16>
    %cst = arith.constant dense<0.000000e+00> : vector<16x128xf32>
    %6 = tpu.matmul %4, %5, %cst {dimension_numbers = #tpu.dot_dimension_numbers<[1], [0], [0], [1], [0, 0, 1, 1], [], []>} : vector<16x128xbf16>, vector<128x128xbf16>, vector<16x128xf32> -> vector<16x128xf32>
    %7 = arith.addf %3, %6 : vector<16x128xf32>
    %c0_6 = arith.constant 0 : index
    %c0_7 = arith.constant 0 : index
    %8 = vector.load %arg7[%c0_6, %c0_7] : memref<16x128xf32, #tpu.memory_space<vmem>>, vector<16x128xf32>
    tpu.vector_store %arg7[%c0_6, %c0_7], %7 {strides = array<i32>} : memref<16x128xf32, #tpu.memory_space<vmem>>, vector<16x128xf32>,
    %c0_i32_8 = arith.constant 0 : i32
    %9 = arith.cmpi eq, %arg2, %c0_i32_8 : i32
    %10 = arith.extui %9 : i1 to i32
    %c0_i32_9 = arith.constant 0 : i32
    %11 = arith.cmpi ne, %10, %c0_i32_9 : i32
    scf.if %11 {
      %c0_10 = arith.constant 0 : index
      %c0_11 = arith.constant 0 : index
      %12 = vector.load %arg7[%c0_10, %c0_11] : memref<16x128xf32, #tpu.memory_space<vmem>>, vector<16x128xf32>
      %13 = arith.truncf %12 : vector<16x128xf32> to vector<16x128xbf16>
      %c0_12 = arith.constant 0 : index
      %c0_13 = arith.constant 0 : index
      %14 = vector.load %arg5[%c0_12, %c0_13] : memref<128x128xbf16, #tpu.memory_space<vmem>>, vector<128x128xbf16>
      %cst_14 = arith.constant dense<0.000000e+00> : vector<16x128xf32>
      %15 = tpu.matmul %13, %14, %cst_14 {dimension_numbers = #tpu.dot_dimension_numbers<[1], [0], [0], [1], [0, 0, 1, 1], [], []>} : vector<16x128xbf16>, vector<128x128xbf16>, vector<16x128xf32> -> vector<16x128xf32>
      %16 = math.tanh %15 : vector<16x128xf32>
      %c0_15 = arith.constant 0 : index
      %c0_16 = arith.constant 0 : index
      %17 = vector.load %arg6[%c0_15, %c0_16] : memref<16x128xf32, #tpu.memory_space<vmem>>, vector<16x128xf32>
      tpu.vector_store %arg6[%c0_15, %c0_16], %16 {strides = array<i32>} : memref<16x128xf32, #tpu.memory_space<vmem>>, vector<16x128xf32>,
    } else {
    }
    return
  }
  func.func @transform_0(%arg0: i32, %arg1: i32, %arg2: i32) -> (i32, i32) {
    %c0_i32 = arith.constant 0 : i32
    return %arg0, %arg2 : i32, i32
  }
  func.func @transform_1(%arg0: i32, %arg1: i32, %arg2: i32) -> (i32, i32) {
    %c0_i32 = arith.constant 0 : i32
    %c0_i32_0 = arith.constant 0 : i32
    return %arg2, %c0_i32 : i32, i32
  }
  func.func @transform_2(%arg0: i32, %arg1: i32, %arg2: i32) -> (i32, i32) {
    %c0_i32 = arith.constant 0 : i32
    %c0_i32_0 = arith.constant 0 : i32
    return %c0_i32, %arg1 : i32, i32
  }
  func.func @transform_3(%arg0: i32, %arg1: i32, %arg2: i32) -> (i32, i32) {
    %c0_i32 = arith.constant 0 : i32
    return %arg0, %arg1 : i32, i32
  }
}

</mosaic_0001>

<llo_original>
// kernel: tpu_custom_call.1
$region0: #{tpu_custom_call.1}
  #allocation0 [shape = 'u32[]', space=smem, size = 0x4, offset = 0x4, fixed_abs, tag = 'smem constant byte address 0x4 - core index']
  #allocation1 [shape = 'u32[144,128]{1,0:T(1,128)}', space=vmem, size = 0x12000, scoped, tag = 'internal scratch']
  #allocation2 [shape = 'f32[16,128]{1,0:T(8,128)}', space=vmem, size = 0x2000, scoped, tag = 'scratch operand']
  %s0 = inlined_call_operand.hbm [shape: bf16[16,128], index: 0, kind: input, shape index: {}]
  %s1 = inlined_call_operand.hbm [shape: bf16[128,128], index: 1, kind: input, shape index: {}]
  %s2 = inlined_call_operand.hbm [shape: bf16[128,128], index: 2, kind: input, shape index: {}]
  %s3 = inlined_call_operand.hbm [shape: f32[16,128], index: 3, kind: output, shape index: {}]
  %s4 = sld [smem:[#allocation0]]
  $region42: #{tpu_custom_call.1} parent=0
    _
  %s6 = ssub.s32 1, %s4
  %s7 = scalar_select 0, %s6, %s4
  $region1: #{tpu_custom_call.1} parent=0
    #allocation3 [shape = 'u8[4096]{0}', space=vmem, size = 0x1000, scoped, tag = 'input window, operand 0, single buffered']
    #allocation4 [shape = 's32[1]{0}', space=sflag, size = 0x4, scoped, tag = 'scoped memory for tpu_custom_call.1']
    #allocation5 [shape = 's32[1]{0}', space=sflag, size = 0x4, scoped, tag = 'scoped memory for tpu_custom_call.1']
    #allocation6 [shape = 'u8[32768]{0}', space=vmem, size = 0x8000, scoped, tag = 'input window, operand 1, single buffered']
    #allocation7 [shape = 's32[1]{0}', space=sflag, size = 0x4, scoped, tag = 'scoped memory for tpu_custom_call.1']
    #allocation8 [shape = 'u8[32768]{0}', space=vmem, size = 0x8000, scoped, tag = 'input window, operand 2, single buffered']
    #allocation9 [shape = 'u8[8192]{0}', space=vmem, size = 0x2000, scoped, tag = 'output window, operand 0, single buffered']
    %8 = vsyncpa [#allocation4], 0
    %9 = vsyncpa [#allocation7], 0
    %10 = vsyncpa [#allocation5], 0
    // Predicated region
    $region2: #{tpu_custom_call.1} parent=1 // pred_check
      _
    $region3: #{tpu_custom_call.1} parent=1 // pred_check_branch
      %12 = sbr.rel (0) target = $region5
    $region4: #{tpu_custom_call.1} parent=1 // pred_region
      %s14 = ssub.s32 128, 128
      %15 = vsyncadd [#allocation4], %s14
      %s16 = sshll.u32 [#allocation3], 4
      %s17 = int_to_ptr.vmem [resolvable:$true] %s16
      %22 = dma.hbm_to_vmem [thread:$0]  %s0, 128, %s17, [#allocation4], 64, 64, 4
    $region5: #{tpu_custom_call.1} parent=1 // pred_fallthru
      _
    // Predicated region
    $region6: #{tpu_custom_call.1} parent=1 // pred_check
      _
    $region7: #{tpu_custom_call.1} parent=1 // pred_check_branch
      %24 = sbr.rel (0) target = $region9
    $region8: #{tpu_custom_call.1} parent=1 // pred_region
      %s26 = ssub.s32 1024, 1024
      %27 = vsyncadd [#allocation7], %s26
      %s28 = sshll.u32 [#allocation6], 4
      %s29 = int_to_ptr.vmem [resolvable:$true] %s28
      %34 = dma.hbm_to_vmem [thread:$0]  %s1, 1024, %s29, [#allocation7], 64, 64, 4
    $region9: #{tpu_custom_call.1} parent=1 // pred_fallthru
      _
    // Predicated region
    $region10: #{tpu_custom_call.1} parent=1 // pred_check
      _
    $region11: #{tpu_custom_call.1} parent=1 // pred_check_branch
      %36 = sbr.rel (0) target = $region13
    $region12: #{tpu_custom_call.1} parent=1 // pred_region
      %s38 = ssub.s32 1024, 1024
      %39 = vsyncadd [#allocation7], %s38
      %s40 = sshll.u32 [#allocation8], 4
      %s41 = int_to_ptr.vmem [resolvable:$true] %s40
      %46 = dma.hbm_to_vmem [thread:$0]  %s2, 1024, %s41, [#allocation7], 64, 64, 4
    $region13: #{tpu_custom_call.1} parent=1 // pred_fallthru
      _
    // Predicated region
    $region14: #{tpu_custom_call.1} parent=1 // pred_check
      _
    $region15: #{tpu_custom_call.1} parent=1 // pred_check_branch
      %48 = sbr.rel (0) target = $region17
    $region16: #{tpu_custom_call.1} parent=1 // pred_region
      %49 = dma.done [#allocation4], 128
    $region17: #{tpu_custom_call.1} parent=1 // pred_fallthru
      _
    // Predicated region
    $region18: #{tpu_custom_call.1} parent=1 // pred_check
      _
    $region19: #{tpu_custom_call.1} parent=1 // pred_check_branch
      %51 = sbr.rel (0) target = $region21
    $region20: #{tpu_custom_call.1} parent=1 // pred_region
      %52 = dma.done [#allocation7], 1024
    $region21: #{tpu_custom_call.1} parent=1 // pred_fallthru
      _
    // Predicated region
    $region22: #{tpu_custom_call.1} parent=1 // pred_check
      _
    $region23: #{tpu_custom_call.1} parent=1 // pred_check_branch
      %54 = sbr.rel (0) target = $region25
    $region24: #{tpu_custom_call.1} parent=1 // pred_region
      %55 = dma.done [#allocation7], 1024
    $region25: #{tpu_custom_call.1} parent=1 // pred_fallthru
      _
    %p57 = scmp.eq.s32.totalorder 0, 0
    // Predicated region
    $region26: #{tpu_custom_call.1} parent=1 // pred_check
      %p58 = pneg %p57
    $region27: #{tpu_custom_call.1} parent=1 // pred_check_branch
      %60 = sbr.rel (%p58) target = $region29
    $region28: #{tpu_custom_call.1} parent=1 // pred_region
      %61 = vst [vmem:[#allocation2] sm:$0xff] 0.0
      %62 = vst [vmem:[#allocation2 + $0x8] sm:$0xff] 0.0
    $region29: #{tpu_custom_call.1} parent=1 // pred_fallthru
      _
    %v63 = vld [vmem:[#allocation2] sm:$0xff]
    %v64 = vld [vmem:[#allocation2 + $0x8] sm:$0xff]
    %v65 = vld [vmem:[#allocation3] sm:$0xf]
    %v66 = vld [vmem:[#allocation3 + $0x4] sm:$0xf]
    %v67 = vld [vmem:[#allocation6] sm:$0xf]
    %v68 = vld [vmem:[#allocation6 + $0x4] sm:$0xf]
    %v69 = vld [vmem:[#allocation6 + $0x8] sm:$0xf]
    %v70 = vld [vmem:[#allocation6 + $0xc] sm:$0xf]
    %v71 = vld [vmem:[#allocation6 + $0x10] sm:$0xf]
    %v72 = vld [vmem:[#allocation6 + $0x14] sm:$0xf]
    %v73 = vld [vmem:[#allocation6 + $0x18] sm:$0xf]
    %v74 = vld [vmem:[#allocation6 + $0x1c] sm:$0xf]
    %v75 = vld [vmem:[#allocation6 + $0x20] sm:$0xf]
    %v76 = vld [vmem:[#allocation6 + $0x24] sm:$0xf]
    %v77 = vld [vmem:[#allocation6 + $0x28] sm:$0xf]
    %v78 = vld [vmem:[#allocation6 + $0x2c] sm:$0xf]
    %v79 = vld [vmem:[#allocation6 + $0x30] sm:$0xf]
    %v80 = vld [vmem:[#allocation6 + $0x34] sm:$0xf]
    %v81 = vld [vmem:[#allocation6 + $0x38] sm:$0xf]
    %v82 = vld [vmem:[#allocation6 + $0x3c] sm:$0xf]
    %v85 = vunpack.c.l.b16 %v65
    %v86 = vunpack.c.l.b16 %v66
    %v87 = vpack.c.b16 %v86, %v85
    %v105 = vunpack.c.l.b16 %v67
    %v106 = vunpack.c.l.b16 %v68
    %v107 = vunpack.c.l.b16 %v69
    %v108 = vunpack.c.l.b16 %v70
    %v109 = vunpack.c.l.b16 %v71
    %v110 = vunpack.c.l.b16 %v72
    %v111 = vunpack.c.l.b16 %v73
    %v112 = vunpack.c.l.b16 %v74
    %v113 = vunpack.c.l.b16 %v75
    %v114 = vunpack.c.l.b16 %v76
    %v115 = vunpack.c.l.b16 %v77
    %v116 = vunpack.c.l.b16 %v78
    %v117 = vunpack.c.l.b16 %v79
    %v118 = vunpack.c.l.b16 %v80
    %v119 = vunpack.c.l.b16 %v81
    %v120 = vunpack.c.l.b16 %v82
    %v121 = vpack.c.b16 %v106, %v105
    %v122 = vpack.c.b16 %v108, %v107
    %v123 = vpack.c.b16 %v110, %v109
    %v124 = vpack.c.b16 %v112, %v111
    %v125 = vpack.c.b16 %v114, %v113
    %v126 = vpack.c.b16 %v116, %v115
    %v127 = vpack.c.b16 %v118, %v117
    %v128 = vpack.c.b16 %v120, %v119
    %137 = vmatprep.subr.bf16.mxu0 0
    %138 = vmatpush1.bf16.msra.mxu0 %v121
    %139 = vmatprep.subr.bf16.mxu0 0
    %140 = vmatpush1.bf16.msra.mxu0 %v122
    %141 = vmatprep.subr.bf16.mxu0 0
    %142 = vmatpush1.bf16.msra.mxu0 %v123
    %143 = vmatprep.subr.bf16.mxu0 0
    %144 = vmatpush1.bf16.msra.mxu0 %v124
    %145 = vmatprep.subr.bf16.mxu0 0
    %146 = vmatpush1.bf16.msra.mxu0 %v125
    %147 = vmatprep.subr.bf16.mxu0 0
    %148 = vmatpush1.bf16.msra.mxu0 %v126
    %149 = vmatprep.subr.bf16.mxu0 0
    %150 = vmatpush1.bf16.msra.mxu0 %v127
    %151 = vmatprep.subr.bf16.mxu0 0
    %152 = vmatpush1.bf16.msra.mxu0 %v128
    %153 = vmatprep.subr.bf16.mxu0 0
    %154 = vmatpush1.bf16.msra.mxu0 0
    %155 = vmatprep.subr.bf16.mxu0 0
    %156 = vmatpush1.bf16.msra.mxu0 0
    %157 = vmatprep.subr.bf16.mxu0 0
    %158 = vmatpush1.bf16.msra.mxu0 0
    %159 = vmatprep.subr.bf16.mxu0 0
    %160 = vmatpush1.bf16.msra.mxu0 0
    %161 = vmatprep.subr.bf16.mxu0 0
    %162 = vmatpush1.bf16.msra.mxu0 0
    %163 = vmatprep.subr.bf16.mxu0 0
    %164 = vmatpush1.bf16.msra.mxu0 0
    %165 = vmatprep.subr.bf16.mxu0 0
    %166 = vmatpush1.bf16.msra.mxu0 0
    %167 = vmatprep.subr.bf16.mxu0 0
    %168 = vmatpush1.bf16.msra.mxu0 0
    %169 = vmatprep.mubr.bf16.mxu0 0
    %170 = vmatmul.mubr.bf16.gmra.mrb[0].mxu0 %v87
    %v171 = vpop.f32.mrb[0].mxu0
    %v172 = vadd.f32 0.0, %v171
    %v173 = vpop.f32.mrb[0].mxu0
    %v174 = vpop.f32.mrb[0].mxu0
    %v175 = vadd.f32 0.0, %v174
    %v176 = vpop.f32.mrb[0].mxu0
    %177 = vdwg.mxu0
    %v178 = vadd.f32 %v63, %v172
    %v179 = vadd.f32 %v64, %v175
    %180 = vst [vmem:[#allocation2] sm:$0xff] %v178
    %181 = vst [vmem:[#allocation2 + $0x8] sm:$0xff] %v179
    // Predicated region
    $region30: #{tpu_custom_call.1} parent=1 // pred_check
      %p182 = pneg %p57
    $region31: #{tpu_custom_call.1} parent=1 // pred_check_branch
      %184 = sbr.rel (%p182) target = $region33
    $region32: #{tpu_custom_call.1} parent=1 // pred_region
      %v185 = vld [vmem:[#allocation2] sm:$0xff]
      %v186 = vld [vmem:[#allocation2 + $0x8] sm:$0xff]
      %v187 = vpack.c.bf16 %v186, %v185
      %v188 = vld [vmem:[#allocation8] sm:$0xf]
      %v189 = vld [vmem:[#allocation8 + $0x4] sm:$0xf]
      %v190 = vld [vmem:[#allocation8 + $0x8] sm:$0xf]
      %v191 = vld [vmem:[#allocation8 + $0xc] sm:$0xf]
      %v192 = vld [vmem:[#allocation8 + $0x10] sm:$0xf]
      %v193 = vld [vmem:[#allocation8 + $0x14] sm:$0xf]
      %v194 = vld [vmem:[#allocation8 + $0x18] sm:$0xf]
      %v195 = vld [vmem:[#allocation8 + $0x1c] sm:$0xf]
      %v196 = vld [vmem:[#allocation8 + $0x20] sm:$0xf]
      %v197 = vld [vmem:[#allocation8 + $0x24] sm:$0xf]
      %v198 = vld [vmem:[#allocation8 + $0x28] sm:$0xf]
      %v199 = vld [vmem:[#allocation8 + $0x2c] sm:$0xf]
      %v200 = vld [vmem:[#allocation8 + $0x30] sm:$0xf]
      %v201 = vld [vmem:[#allocation8 + $0x34] sm:$0xf]
      %v202 = vld [vmem:[#allocation8 + $0x38] sm:$0xf]
      %v203 = vld [vmem:[#allocation8 + $0x3c] sm:$0xf]
      %v220 = vunpack.c.l.b16 %v188
      %v221 = vunpack.c.l.b16 %v189
      %v222 = vunpack.c.l.b16 %v190
      %v223 = vunpack.c.l.b16 %v191
      %v224 = vunpack.c.l.b16 %v192
      %v225 = vunpack.c.l.b16 %v193
      %v226 = vunpack.c.l.b16 %v194
      %v227 = vunpack.c.l.b16 %v195
      %v228 = vunpack.c.l.b16 %v196
      %v229 = vunpack.c.l.b16 %v197
      %v230 = vunpack.c.l.b16 %v198
      %v231 = vunpack.c.l.b16 %v199
      %v232 = vunpack.c.l.b16 %v200
      %v233 = vunpack.c.l.b16 %v201
      %v234 = vunpack.c.l.b16 %v202
      %v235 = vunpack.c.l.b16 %v203
      %v236 = vpack.c.b16 %v221, %v220
      %v237 = vpack.c.b16 %v223, %v222
      %v238 = vpack.c.b16 %v225, %v224
      %v239 = vpack.c.b16 %v227, %v226
      %v240 = vpack.c.b16 %v229, %v228
      %v241 = vpack.c.b16 %v231, %v230
      %v242 = vpack.c.b16 %v233, %v232
      %v243 = vpack.c.b16 %v235, %v234
      %252 = vmatprep.subr.bf16.mxu0 0
      %253 = vmatpush1.bf16.msra.mxu0 %v236
      %254 = vmatprep.subr.bf16.mxu0 0
      %255 = vmatpush1.bf16.msra.mxu0 %v237
      %256 = vmatprep.subr.bf16.mxu0 0
      %257 = vmatpush1.bf16.msra.mxu0 %v238
      %258 = vmatprep.subr.bf16.mxu0 0
      %259 = vmatpush1.bf16.msra.mxu0 %v239
      %260 = vmatprep.subr.bf16.mxu0 0
      %261 = vmatpush1.bf16.msra.mxu0 %v240
      %262 = vmatprep.subr.bf16.mxu0 0
      %263 = vmatpush1.bf16.msra.mxu0 %v241
      %264 = vmatprep.subr.bf16.mxu0 0
      %265 = vmatpush1.bf16.msra.mxu0 %v242
      %266 = vmatprep.subr.bf16.mxu0 0
      %267 = vmatpush1.bf16.msra.mxu0 %v243
      %268 = vmatprep.subr.bf16.mxu0 0
      %269 = vmatpush1.bf16.msra.mxu0 0
      %270 = vmatprep.subr.bf16.mxu0 0
      %271 = vmatpush1.bf16.msra.mxu0 0
      %272 = vmatprep.subr.bf16.mxu0 0
      %273 = vmatpush1.bf16.msra.mxu0 0
      %274 = vmatprep.subr.bf16.mxu0 0
      %275 = vmatpush1.bf16.msra.mxu0 0
      %276 = vmatprep.subr.bf16.mxu0 0
      %277 = vmatpush1.bf16.msra.mxu0 0
      %278 = vmatprep.subr.bf16.mxu0 0
      %279 = vmatpush1.bf16.msra.mxu0 0
      %280 = vmatprep.subr.bf16.mxu0 0
      %281 = vmatpush1.bf16.msra.mxu0 0
      %282 = vmatprep.subr.bf16.mxu0 0
      %283 = vmatpush1.bf16.msra.mxu0 0
      %284 = vmatprep.mubr.bf16.mxu0 0
      %285 = vmatmul.mubr.bf16.gmra.mrb[0].mxu0 %v187
      %v286 = vpop.f32.mrb[0].mxu0
      %v287 = vadd.f32 0.0, %v286
      %v288 = vpop.f32.mrb[0].mxu0
      %v289 = vpop.f32.mrb[0].mxu0
      %v290 = vadd.f32 0.0, %v289
      %v291 = vpop.f32.mrb[0].mxu0
      %292 = vdwg.mxu0
      %v293 = vtanh.pop %v287
      %v294 = vtanh.pop %v290
      %295 = vst [vmem:[#allocation9] sm:$0xff] %v293
      %296 = vst [vmem:[#allocation9 + $0x8] sm:$0xff] %v294
    $region33: #{tpu_custom_call.1} parent=1 // pred_fallthru
      _
    // Predicated region
    $region34: #{tpu_custom_call.1} parent=1 // pred_check
      _
    $region35: #{tpu_custom_call.1} parent=1 // pred_check_branch
      %298 = sbr.rel (0) target = $region37
    $region36: #{tpu_custom_call.1} parent=1 // pred_region
      %s300 = ssub.s32 256, 256
      %301 = vsyncadd [#allocation5], %s300
      %s302 = sshll.u32 [#allocation9], 4
      %s303 = int_to_ptr.vmem [resolvable:$true] %s302
      %308 = dma.vmem_to_hbm [thread:$0]  %s303, 256, %s3, [#allocation5], 128, 128, 8
    $region37: #{tpu_custom_call.1} parent=1 // pred_fallthru
      _
    // Predicated region
    $region38: #{tpu_custom_call.1} parent=1 // pred_check
      _
    $region39: #{tpu_custom_call.1} parent=1 // pred_check_branch
      %310 = sbr.rel (0) target = $region41
    $region40: #{tpu_custom_call.1} parent=1 // pred_region
      %311 = dma.done [#allocation5], 256
    $region41: #{tpu_custom_call.1} parent=1 // pred_fallthru
      _
    %312 = vsyncpa [#allocation4], 1
    %313 = vsyncpa [#allocation7], 1
    %314 = vsyncpa [#allocation5], 1

</llo_original>
